<compile_context>
chip_gen: v6e
topology: v6e:2x2x1
jax: 0.10.0
libtpu: 0.0.40
codegen_flags: <defaults>
</compile_context>

<pallas_src>
import math
import jax
import jax.numpy as jnp
from jax.experimental import pallas as pl
from jax.experimental.pallas import tpu as pltpu


# ---------------------------------------------------------------------------
# kernel
# ---------------------------------------------------------------------------
def _make_mlp_kernel(compute_dtype):
    def kernel(x_ref, w1_ref, b1_ref, w2_ref, b2_ref, o_ref):
        # x_ref : (TB, G*din)           w1_ref: (1, G*din, G*hidden)   b1_ref: (1, G*hidden)
        # w2_ref: (1, G*hidden, G*dout) b2_ref: (1, G*dout)            o_ref : (TB, G*dout)
        x = x_ref[...].astype(compute_dtype)
        h = jnp.dot(x, w1_ref[0].astype(compute_dtype),
                    preferred_element_type=jnp.float32)
        h = jnp.maximum(h + b1_ref[...], 0.0)                      # bias + ReLU in f32 (VPU)
        y = jnp.dot(h.astype(compute_dtype), w2_ref[0].astype(compute_dtype),
                    preferred_element_type=jnp.float32)
        y = y + b2_ref[...]
        o_ref[...] = y.astype(o_ref.dtype)                         # lane-dense store
    return kernel


# ---------------------------------------------------------------------------
# wrapper helpers
# ---------------------------------------------------------------------------
def _pick_group(nb, batch_tile, din, hidden, dout, itemsize=4,
                vmem_budget_bytes=20 * 1024 * 1024):
    """Largest divisor G of nb whose packed per-step tiles are BlockSpec-legal
    (G == nb, i.e. full-dim blocks, or G*{din,hidden,dout} all multiples of 128)
    and whose double-buffered tiles fit the VMEM budget."""
    legal = []
    for G in range(1, nb + 1):
        if nb % G:
            continue
        if G == nb or all((G * d) % 128 == 0 for d in (din, hidden, dout)):
            legal.append(G)

    def step_bytes(G):
        return 2 * itemsize * (batch_tile * G * din
                               + G * din * G * hidden + G * hidden
                               + G * hidden * G * dout + G * dout
                               + batch_tile * G * dout)

    fitting = [G for G in legal if step_bytes(G) <= vmem_budget_bytes]
    # legal is never empty (G == nb always qualifies); fall back to the smallest
    # legal group if even the smallest aligned group overflows the budget.
    return max(fitting) if fitting else min(legal)


def _block_diag_pack(w, C, G):
    """w: (nb, din, dout) -> (C, G*din, G*dout), block-diagonal per group of G blocks."""
    nb, din, dout = w.shape
    w = w.reshape(C, G, din, dout)
    eye = jnp.eye(G, dtype=w.dtype)
    wbd = jnp.einsum('cgij,gh->cgihj', w, eye)        # (C, G, din, G, dout)
    return wbd.reshape(C, G * din, G * dout)


# ---------------------------------------------------------------------------
# forward
# ---------------------------------------------------------------------------
def mlp_forward(x, w1, b1, w2, b2, *, group_size=None, batch_tile=None,
                compute_dtype=jnp.float32):
    """x: (B, num_blocks, in_dim). Returns (B, num_blocks, out_dim)."""
    B, nb, din = x.shape
    hidden = w1.shape[-1]
    dout = w2.shape[-1]

    # --- tiling choices -----------------------------------------------------
    TB = batch_tile if batch_tile is not None else (B if B <= 512 else 512)
    G = group_size if group_size is not None else _pick_group(nb, TB, din, hidden, dout)
    assert nb % G == 0, "group_size must divide num_blocks"
    C = nb // G
    nbt = pl.cdiv(B, TB)

    # --- one-time parameter packing (block-diagonal per group) --------------
    w1_bd = _block_diag_pack(w1, C, G)                # (C, G*din,    G*hidden)
    w2_bd = _block_diag_pack(w2, C, G)                # (C, G*hidden, G*dout)
    b1_f = b1.reshape(C, G * hidden)
    b2_f = b2.reshape(C, G * dout)

    # free contiguous views (no extra HBM pass, unlike a transpose)
    x_f = x.reshape(B, nb * din)

    cost = pl.CostEstimate(
        flops=2 * B * nb * (din * hidden + hidden * dout),
        transcendentals=0,
        bytes_accessed=4 * (x_f.size + w1_bd.size + b1_f.size
                            + w2_bd.size + b2_f.size + B * nb * dout),
    )

    out_flat = pl.pallas_call(
        _make_mlp_kernel(compute_dtype),
        out_shape=jax.ShapeDtypeStruct((B, nb * dout), x.dtype),
        grid_spec=pltpu.PrefetchScalarGridSpec(
            num_scalar_prefetch=0,
            # B-tile axis innermost -> packed weights stay VMEM-resident across B tiles.
            grid=(C, nbt),
            in_specs=[
                pl.BlockSpec((TB, G * din),             lambda c, b: (b, c)),
                pl.BlockSpec((1, G * din, G * hidden),  lambda c, b: (c, 0, 0)),
                pl.BlockSpec((1, G * hidden),           lambda c, b: (c, 0)),
                pl.BlockSpec((1, G * hidden, G * dout), lambda c, b: (c, 0, 0)),
                pl.BlockSpec((1, G * dout),             lambda c, b: (c, 0)),
            ],
            out_specs=pl.BlockSpec((TB, G * dout), lambda c, b: (b, c)),
        ),
        compiler_params=pltpu.CompilerParams(
            dimension_semantics=("parallel", "parallel"),
            vmem_limit_bytes=32 * 1024 * 1024,
        ),
        cost_estimate=cost,
    )(x_f, w1_bd, b1_f, w2_bd, b2_f)

    return out_flat.reshape(B, nb, dout)


# ---------------------------------------------------------------------------
# params / reference
# ---------------------------------------------------------------------------
def init_mlp_params(key, in_dim, out_dim, num_blocks, hidden_dim=32):
    """Matches Weight.__init__: uniform(-1/sqrt(dout), 1/sqrt(dout)) per layer."""
    k1, k2, k3, k4 = jax.random.split(key, 4)
    i1 = 1.0 / math.sqrt(hidden_dim)
    i2 = 1.0 / math.sqrt(out_dim)
    w1 = jax.random.uniform(k1, (num_blocks, in_dim, hidden_dim),
                            minval=-i1, maxval=i1, dtype=jnp.float32)
    b1 = jax.random.uniform(k2, (num_blocks, hidden_dim),
                            minval=-i1, maxval=i1, dtype=jnp.float32)
    w2 = jax.random.uniform(k3, (num_blocks, hidden_dim, out_dim),
                            minval=-i2, maxval=i2, dtype=jnp.float32)
    b2 = jax.random.uniform(k4, (num_blocks, out_dim),
                            minval=-i2, maxval=i2, dtype=jnp.float32)
    return w1, b1, w2, b2


def mlp_reference(x, w1, b1, w2, b2):
    h = jnp.einsum('bnd,ndh->bnh', x, w1) + b1[None, :, :]
    h = jnp.maximum(h, 0.0)
    return jnp.einsum('bnh,nho->bno', h, w2) + b2[None, :, :]


# ---------------------------------------------------------------------------
if __name__ == "__main__":
    B, num_blocks, in_dim, hidden_dim, out_dim = 16, 16, 16, 32, 8

    key = jax.random.PRNGKey(0)
    kx, kp = jax.random.split(key)
    x = jax.random.normal(kx, (B, num_blocks, in_dim), dtype=jnp.float32)
    w1, b1, w2, b2 = init_mlp_params(kp, in_dim, out_dim, num_blocks, hidden_dim)

    # batch_tile=8 -> grid=(C, 2): exercises weight residency across B tiles and
    # gives >=2 parallel steps (keeps both v7x TensorCores busy).
    y = mlp_forward(x, w1, b1, w2, b2, batch_tile=8)
    y = jax.block_until_ready(y)

    y_ref = mlp_reference(x, w1, b1, w2, b2)
    assert y.shape == (B, num_blocks, out_dim)
    assert jnp.allclose(y, y_ref, atol=5e-5, rtol=5e-5)

    print("KERNEL_OK")
</pallas_src>

<mosaic_0001>
module attributes {stable_mosaic.version = 11 : i64} {
  func.func @kernel(%arg0: i32, %arg1: i32, %arg2: memref<8x256xf32, #tpu.memory_space<vmem>>, %arg3: memref<1x256x512xf32, #tpu.memory_space<vmem>>, %arg4: memref<1x512xf32, #tpu.memory_space<vmem>>, %arg5: memref<1x512x128xf32, #tpu.memory_space<vmem>>, %arg6: memref<1x128xf32, #tpu.memory_space<vmem>>, %arg7: memref<8x128xf32, #tpu.memory_space<vmem>>) attributes {dimension_semantics = [#tpu.dimension_semantics<parallel>, #tpu.dimension_semantics<parallel>], iteration_bounds = array<i64: 1, 2>, scalar_prefetch = 0 : i64, scratch_operands = 0 : i64, tpu.core_type = #tpu.core_type<tc>, window_params = [{transform_indices = @transform_0, window_bounds = array<i64: 8, 256>}, {transform_indices = @transform_1, window_bounds = array<i64: 1, 256, 512>}, {transform_indices = @transform_2, window_bounds = array<i64: 1, 512>}, {transform_indices = @transform_3, window_bounds = array<i64: 1, 512, 128>}, {transform_indices = @transform_4, window_bounds = array<i64: 1, 128>}, {transform_indices = @transform_5, window_bounds = array<i64: 8, 128>}]} {
    %c0 = arith.constant 0 : index
    %c0_0 = arith.constant 0 : index
    %0 = vector.load %arg2[%c0, %c0_0] : memref<8x256xf32, #tpu.memory_space<vmem>>, vector<8x256xf32>
    %c0_1 = arith.constant 0 : index
    %c0_2 = arith.constant 0 : index
    %c0_3 = arith.constant 0 : index
    %1 = vector.load %arg3[%c0_1, %c0_2, %c0_3] : memref<1x256x512xf32, #tpu.memory_space<vmem>>, vector<1x256x512xf32>
    %2 = vector.shape_cast %1 : vector<1x256x512xf32> to vector<256x512xf32>
    %cst = arith.constant dense<0.000000e+00> : vector<8x512xf32>
    %3 = tpu.matmul %0, %2, %cst {dimension_numbers = #tpu.dot_dimension_numbers<[1], [0], [0], [1], [0, 0, 1, 1], [], []>} : vector<8x256xf32>, vector<256x512xf32>, vector<8x512xf32> -> vector<8x512xf32>
    %c0_4 = arith.constant 0 : index
    %c0_5 = arith.constant 0 : index
    %4 = vector.load %arg4[%c0_4, %c0_5] : memref<1x512xf32, #tpu.memory_space<vmem>>, vector<1x512xf32>
    %5 = vector.broadcast %4 : vector<1x512xf32> to vector<8x512xf32>
    %6 = arith.addf %3, %5 : vector<8x512xf32>
    %cst_6 = arith.constant 0.000000e+00 : f32
    %7 = vector.broadcast %cst_6 : f32 to vector<8x512xf32>
    %8 = arith.maximumf %6, %7 : vector<8x512xf32>
    %c0_7 = arith.constant 0 : index
    %c0_8 = arith.constant 0 : index
    %c0_9 = arith.constant 0 : index
    %9 = vector.load %arg5[%c0_7, %c0_8, %c0_9] : memref<1x512x128xf32, #tpu.memory_space<vmem>>, vector<1x512x128xf32>
    %10 = vector.shape_cast %9 : vector<1x512x128xf32> to vector<512x128xf32>
    %cst_10 = arith.constant dense<0.000000e+00> : vector<8x128xf32>
    %11 = tpu.matmul %8, %10, %cst_10 {dimension_numbers = #tpu.dot_dimension_numbers<[1], [0], [0], [1], [0, 0, 1, 1], [], []>} : vector<8x512xf32>, vector<512x128xf32>, vector<8x128xf32> -> vector<8x128xf32>
    %c0_11 = arith.constant 0 : index
    %c0_12 = arith.constant 0 : index
    %12 = vector.load %arg6[%c0_11, %c0_12] : memref<1x128xf32, #tpu.memory_space<vmem>>, vector<1x128xf32>
    %13 = vector.broadcast %12 : vector<1x128xf32> to vector<8x128xf32>
    %14 = arith.addf %11, %13 : vector<8x128xf32>
    %c0_13 = arith.constant 0 : index
    %c0_14 = arith.constant 0 : index
    %15 = vector.load %arg7[%c0_13, %c0_14] : memref<8x128xf32, #tpu.memory_space<vmem>>, vector<8x128xf32>
    tpu.vector_store %arg7[%c0_13, %c0_14], %14 {strides = array<i32>} : memref<8x128xf32, #tpu.memory_space<vmem>>, vector<8x128xf32>,
    return
  }
  func.func @transform_0(%arg0: i32, %arg1: i32) -> (i32, i32) {
    %c0_i32 = arith.constant 0 : i32
    return %arg1, %arg0 : i32, i32
  }
  func.func @transform_1(%arg0: i32, %arg1: i32) -> (i32, i32, i32) {
    %c0_i32 = arith.constant 0 : i32
    %c0_i32_0 = arith.constant 0 : i32
    %c0_i32_1 = arith.constant 0 : i32
    return %arg0, %c0_i32, %c0_i32_0 : i32, i32, i32
  }
  func.func @transform_2(%arg0: i32, %arg1: i32) -> (i32, i32) {
    %c0_i32 = arith.constant 0 : i32
    %c0_i32_0 = arith.constant 0 : i32
    return %arg0, %c0_i32 : i32, i32
  }
  func.func @transform_3(%arg0: i32, %arg1: i32) -> (i32, i32, i32) {
    %c0_i32 = arith.constant 0 : i32
    %c0_i32_0 = arith.constant 0 : i32
    %c0_i32_1 = arith.constant 0 : i32
    return %arg0, %c0_i32, %c0_i32_0 : i32, i32, i32
  }
  func.func @transform_4(%arg0: i32, %arg1: i32) -> (i32, i32) {
    %c0_i32 = arith.constant 0 : i32
    %c0_i32_0 = arith.constant 0 : i32
    return %arg0, %c0_i32 : i32, i32
  }
  func.func @transform_5(%arg0: i32, %arg1: i32) -> (i32, i32) {
    %c0_i32 = arith.constant 0 : i32
    return %arg1, %arg0 : i32, i32
  }
}

</mosaic_0001>

<llo_original>
// kernel: tpu_custom_call.1
$region0: #{tpu_custom_call.1}
  #allocation0 [shape = 'u32[]', space=smem, size = 0x4, offset = 0x4, fixed_abs, tag = 'smem constant byte address 0x4 - core index']
  #allocation1 [shape = 'u32[144,128]{1,0:T(1,128)}', space=vmem, size = 0x12000, scoped, tag = 'internal scratch']
  %s0 = inlined_call_operand.hbm [shape: f32[16,256], index: 0, kind: input, shape index: {}]
  %s1 = inlined_call_operand.hbm [shape: f32[1,256,512], index: 1, kind: input, shape index: {}]
  %s2 = inlined_call_operand.hbm [shape: f32[1,512], index: 2, kind: input, shape index: {}]
  %s3 = inlined_call_operand.hbm [shape: f32[1,512,128], index: 3, kind: input, shape index: {}]
  %s4 = inlined_call_operand.vmem [shape: f32[1,128], index: 4, kind: input, shape index: {}]
  %s5 = inlined_call_operand.hbm [shape: f32[16,128], index: 5, kind: output, shape index: {}]
  %s6 = sld [smem:[#allocation0]]
  $region69: #{tpu_custom_call.1} parent=0
    _
  %s8 = ssub.s32 1, %s6
  %s9 = scalar_select 0, %s8, %s6
  $region1: #{tpu_custom_call.1} parent=0
    #allocation2 [shape = 'u8[16384]{0}', space=vmem, size = 0x4000, scoped, tag = 'input window, operand 0']
    #allocation3 [shape = 's32[2]{0}', space=sflag, size = 0x8, scoped, tag = 'scoped memory for tpu_custom_call.1']
    #allocation4 [shape = 's32[2]{0}', space=sflag, size = 0x8, scoped, tag = 'scoped memory for tpu_custom_call.1']
    #allocation5 [shape = 'u8[524288]{0}', space=vmem, size = 0x80000, scoped, tag = 'input window, operand 1, single buffered']
    #allocation6 [shape = 's32[1]{0}', space=sflag, size = 0x4, scoped, tag = 'scoped memory for tpu_custom_call.1']
    #allocation7 [shape = 'u8[2048]{0}', space=vmem, size = 0x800, scoped, tag = 'input window, operand 2, single buffered']
    #allocation8 [shape = 'u8[262144]{0}', space=vmem, size = 0x40000, scoped, tag = 'input window, operand 3, single buffered']
    #allocation9 [shape = 's32[1]{0}', space=sflag, size = 0x4, scoped, tag = 'scoped memory for tpu_custom_call.1']
    #allocation10 [shape = 'u8[8192]{0}', space=vmem, size = 0x2000, scoped, tag = 'output window, operand 0']
    %10 = vsyncpa [#allocation3], 0
    %s11 = scalar_lea.sflag [#allocation3], 1
    %12 = vsyncpa %s11, 0
    %13 = vsyncpa [#allocation6], 0
    %14 = vsyncpa [#allocation9], 0
    %15 = vsyncpa [#allocation4], 0
    %s16 = scalar_lea.sflag [#allocation4], 1
    %17 = vsyncpa %s16, 0
    loop: start=0, step=1, limit=4
    $region2: #{tpu_custom_call.1} parent=1 // loop_pre_header
      _
    $region3: #{tpu_custom_call.1} parent=1 // loop_header
      %s19 = sphi 0, %s23
      %p20 = scmp.ge.s32.totalorder %s19, 4
      %s26 = sphi 0, %s38
      %s27 = sphi 0, %s34
      %s28 = sphi 0, %s26
      %s29 = sphi 0, %s27
      %s30 = sphi 0, %s28
      %s31 = sphi 0, %s29
      %s43 = sphi 0, %s45
      %s46 = sphi 0, %s43
      %s47 = sphi 0, %s46
      %s63 = sphi 0, %s47
      %s69 = sphi 0, %s71
      %s72 = sphi 0, %s69
      %s73 = sphi 0, %s72
      %s89 = sphi 0, %s73
      %s95 = sphi 0, %s97
      %s98 = sphi 0, %s95
      %s99 = sphi 0, %s98
      %s115 = sphi 0, %s99
      %s121 = sphi 0, %s123
      %s124 = sphi 0, %s121
      %s125 = sphi 0, %s124
      %s141 = sphi 0, %s125
      %s147 = sphi 0, %s149
      %s150 = sphi 0, %s147
      %s151 = sphi 0, %s150
      %s167 = sphi 0, %s151
      %s175 = sphi 0, %s177
      %s178 = sphi 0, %s175
      %s179 = sphi 0, %s178
      %s195 = sphi 0, %s179
    $region4: #{tpu_custom_call.1} parent=1 // loop_header_branch
      %22 = sbr.rel (%p20) target = $region8
    $region5: #{tpu_custom_call.1} parent=1 // loop_body
      %s24 = ssub.s32 %s19, 1
      %s25 = ssub.s32 %s19, 2
      %s32 = sadd.s32 1, %s27
      %p33 = scmp.ge.s32.totalorder %s32, 2
      %s34 = scalar_select %p33, 0, %s32
      %s35 = sadd.s32 1, %s26
      %s36 = scalar_select %p33, %s35, %s26
      %p37 = scmp.ge.s32.totalorder %s36, 1
      %s38 = scalar_select %p37, 0, %s36
      %s39 = ssub.s32 %s27, %s34
      %s40 = ssub.s32 %s26, %s38
      %s41 = sor.u32 %s39, %s40
      %p42 = scmp.eq.s32.totalorder %s41, 0
      %s44 = sadd.s32 %s43, 1
      %s45 = scalar_select %p42, %s43, %s44
      %p48 = pneg %p42
      %p49 = scmp.eq.s32.totalorder %s19, 1
      %p50 = por %p48, %p49
      %p51 = scmp.ne.s32.totalorder %s43, %s46
      %p52 = scmp.eq.s32.totalorder %s19, 0
      %p53 = por %p51, %p52
      %p54 = scmp.ne.s32.totalorder %s43, %s46
      %p55 = scmp.eq.s32.totalorder %s24, 1
      %p56 = por %p54, %p55
      %p57 = scmp.ne.s32.totalorder %s46, %s47
      %p58 = scmp.eq.s32.totalorder %s24, 0
      %p59 = por %p57, %p58
      %p60 = scmp.ne.s32.totalorder %s46, %s47
      %p61 = scmp.eq.s32.totalorder %s25, 1
      %p62 = por %p60, %p61
      %p64 = scmp.ne.s32.totalorder %s47, %s63
      %p65 = scmp.eq.s32.totalorder %s25, 0
      %p66 = por %p64, %p65
      %s67 = ssub.s32 %s26, %s38
      %p68 = scmp.eq.s32.totalorder %s67, 0
      %s70 = sadd.s32 %s69, 1
      %s71 = scalar_select %p68, %s69, %s70
      %p74 = pneg %p68
      %p75 = scmp.eq.s32.totalorder %s19, 1
      %p76 = por %p74, %p75
      %p77 = scmp.ne.s32.totalorder %s69, %s72
      %p78 = scmp.eq.s32.totalorder %s19, 0
      %p79 = por %p77, %p78
      %p80 = scmp.ne.s32.totalorder %s69, %s72
      %p81 = scmp.eq.s32.totalorder %s24, 1
      %p82 = por %p80, %p81
      %p83 = scmp.ne.s32.totalorder %s72, %s73
      %p84 = scmp.eq.s32.totalorder %s24, 0
      %p85 = por %p83, %p84
      %p86 = scmp.ne.s32.totalorder %s72, %s73
      %p87 = scmp.eq.s32.totalorder %s25, 1
      %p88 = por %p86, %p87
      %p90 = scmp.ne.s32.totalorder %s73, %s89
      %p91 = scmp.eq.s32.totalorder %s25, 0
      %p92 = por %p90, %p91
      %s93 = ssub.s32 %s26, %s38
      %p94 = scmp.eq.s32.totalorder %s93, 0
      %s96 = sadd.s32 %s95, 1
      %s97 = scalar_select %p94, %s95, %s96
      %p100 = pneg %p94
      %p101 = scmp.eq.s32.totalorder %s19, 1
      %p102 = por %p100, %p101
      %p103 = scmp.ne.s32.totalorder %s95, %s98
      %p104 = scmp.eq.s32.totalorder %s19, 0
      %p105 = por %p103, %p104
      %p106 = scmp.ne.s32.totalorder %s95, %s98
      %p107 = scmp.eq.s32.totalorder %s24, 1
      %p108 = por %p106, %p107
      %p109 = scmp.ne.s32.totalorder %s98, %s99
      %p110 = scmp.eq.s32.totalorder %s24, 0
      %p111 = por %p109, %p110
      %p112 = scmp.ne.s32.totalorder %s98, %s99
      %p113 = scmp.eq.s32.totalorder %s25, 1
      %p114 = por %p112, %p113
      %p116 = scmp.ne.s32.totalorder %s99, %s115
      %p117 = scmp.eq.s32.totalorder %s25, 0
      %p118 = por %p116, %p117
      %s119 = ssub.s32 %s26, %s38
      %p120 = scmp.eq.s32.totalorder %s119, 0
      %s122 = sadd.s32 %s121, 1
      %s123 = scalar_select %p120, %s121, %s122
      %p126 = pneg %p120
      %p127 = scmp.eq.s32.totalorder %s19, 1
      %p128 = por %p126, %p127
      %p129 = scmp.ne.s32.totalorder %s121, %s124
      %p130 = scmp.eq.s32.totalorder %s19, 0
      %p131 = por %p129, %p130
      %p132 = scmp.ne.s32.totalorder %s121, %s124
      %p133 = scmp.eq.s32.totalorder %s24, 1
      %p134 = por %p132, %p133
      %p135 = scmp.ne.s32.totalorder %s124, %s125
      %p136 = scmp.eq.s32.totalorder %s24, 0
      %p137 = por %p135, %p136
      %p138 = scmp.ne.s32.totalorder %s124, %s125
      %p139 = scmp.eq.s32.totalorder %s25, 1
      %p140 = por %p138, %p139
      %p142 = scmp.ne.s32.totalorder %s125, %s141
      %p143 = scmp.eq.s32.totalorder %s25, 0
      %p144 = por %p142, %p143
      %s145 = ssub.s32 %s26, %s38
      %p146 = scmp.eq.s32.totalorder %s145, 0
      %s148 = sadd.s32 %s147, 1
      %s149 = scalar_select %p146, %s147, %s148
      %p152 = pneg %p146
      %p153 = scmp.eq.s32.totalorder %s19, 1
      %p154 = por %p152, %p153
      %p155 = scmp.ne.s32.totalorder %s147, %s150
      %p156 = scmp.eq.s32.totalorder %s19, 0
      %p157 = por %p155, %p156
      %p158 = scmp.ne.s32.totalorder %s147, %s150
      %p159 = scmp.eq.s32.totalorder %s24, 1
      %p160 = por %p158, %p159
      %p161 = scmp.ne.s32.totalorder %s150, %s151
      %p162 = scmp.eq.s32.totalorder %s24, 0
      %p163 = por %p161, %p162
      %p164 = scmp.ne.s32.totalorder %s150, %s151
      %p165 = scmp.eq.s32.totalorder %s25, 1
      %p166 = por %p164, %p165
      %p168 = scmp.ne.s32.totalorder %s151, %s167
      %p169 = scmp.eq.s32.totalorder %s25, 0
      %p170 = por %p168, %p169
      %s171 = ssub.s32 %s27, %s34
      %s172 = ssub.s32 %s26, %s38
      %s173 = sor.u32 %s171, %s172
      %p174 = scmp.eq.s32.totalorder %s173, 0
      %s176 = sadd.s32 %s175, 1
      %s177 = scalar_select %p174, %s175, %s176
      %p180 = pneg %p174
      %p181 = scmp.eq.s32.totalorder %s19, 1
      %p182 = por %p180, %p181
      %p183 = scmp.ne.s32.totalorder %s175, %s178
      %p184 = scmp.eq.s32.totalorder %s19, 0
      %p185 = por %p183, %p184
      %p186 = scmp.ne.s32.totalorder %s175, %s178
      %p187 = scmp.eq.s32.totalorder %s24, 1
      %p188 = por %p186, %p187
      %p189 = scmp.ne.s32.totalorder %s178, %s179
      %p190 = scmp.eq.s32.totalorder %s24, 0
      %p191 = por %p189, %p190
      %p192 = scmp.ne.s32.totalorder %s178, %s179
      %p193 = scmp.eq.s32.totalorder %s25, 1
      %p194 = por %p192, %p193
      %p196 = scmp.ne.s32.totalorder %s179, %s195
      %p197 = scmp.eq.s32.totalorder %s25, 0
      %p198 = por %p196, %p197
      %p199 = scmp.le.s32.totalorder 1, %s19
      %p200 = scmp.lt.s32.totalorder %s19, 3
      %p201 = pnand %p199, %p200
      %p202 = pneg %p201
      // Predicated region
      $region9: #{tpu_custom_call.1} parent=5 // pred_check
        _
      $region10: #{tpu_custom_call.1} parent=5 // pred_check_branch
        %204 = sbr.rel (%p201) target = $region12
      $region11: #{tpu_custom_call.1} parent=5 // pred_region
        %s205 = ssub.s32 %s19, 1
        // Predicated region
        $region13: #{tpu_custom_call.1} parent=11 // pred_check
          %p206 = pneg %p85
        $region14: #{tpu_custom_call.1} parent=11 // pred_check_branch
          %208 = sbr.rel (%p206) target = $region16
        $region15: #{tpu_custom_call.1} parent=11 // pred_region
          %s210 = ssub.s32 16384, 16384
          %211 = vsyncadd [#allocation6], %s210
          %s212 = smul.addr %s28, 128
          %s213 = smul.addr %s212, 128
          %s214 = scalar_lea.hbm %s1, %s213
          %s215 = sshll.u32 [#allocation5], 4
          %s216 = int_to_ptr.vmem [resolvable:$true] %s215
          %221 = dma.hbm_to_vmem [thread:$0]  %s214, 16384, %s216, [#allocation6], 512, 512, 32
        $region16: #{tpu_custom_call.1} parent=11 // pred_fallthru
          _
        // Predicated region
        $region17: #{tpu_custom_call.1} parent=11 // pred_check
          %p222 = pneg %p111
        $region18: #{tpu_custom_call.1} parent=11 // pred_check_branch
          %224 = sbr.rel (%p222) target = $region20
        $region19: #{tpu_custom_call.1} parent=11 // pred_region
          %s226 = ssub.s32 64, 64
          %227 = vsyncadd [#allocation6], %s226
          %s228 = smul.addr %s28, 4
          %s229 = smul.addr %s228, 16
          %s230 = scalar_lea.hbm %s2, %s229
          %s232 = sshll.u32 [#allocation7], 4
          %s233 = int_to_ptr.vmem [resolvable:$true] %s232
          %235 = dma.hbm_to_vmem [thread:$0]  %s230, 64, %s233, [#allocation6]
        $region20: #{tpu_custom_call.1} parent=11 // pred_fallthru
          _
        // Predicated region
        $region21: #{tpu_custom_call.1} parent=11 // pred_check
          %p236 = pneg %p137
        $region22: #{tpu_custom_call.1} parent=11 // pred_check_branch
          %238 = sbr.rel (%p236) target = $region24
        $region23: #{tpu_custom_call.1} parent=11 // pred_region
          %s240 = ssub.s32 8192, 8192
          %241 = vsyncadd [#allocation9], %s240
          %s242 = smul.addr %s28, 64
          %s243 = smul.addr %s242, 128
          %s244 = scalar_lea.hbm %s3, %s243
          %s245 = sshll.u32 [#allocation8], 4
          %s246 = int_to_ptr.vmem [resolvable:$true] %s245
          %251 = dma.hbm_to_vmem [thread:$0]  %s244, 8192, %s246, [#allocation9], 128, 128, 8
        $region24: #{tpu_custom_call.1} parent=11 // pred_fallthru
          _
        // Predicated region
        $region25: #{tpu_custom_call.1} parent=11 // pred_check
          %p252 = pneg %p163
        $region26: #{tpu_custom_call.1} parent=11 // pred_check_branch
          %254 = sbr.rel (%p252) target = $region28
        $region27: #{tpu_custom_call.1} parent=11 // pred_region
          %p255 = scmp.lt.s32.totalorder %s28, 0
          %s256 = scalar_select %p255, %s28, 0
          %s257 = scalar_lea.vmem %s4, %s256
        $region28: #{tpu_custom_call.1} parent=11 // pred_fallthru
          _
      $region12: #{tpu_custom_call.1} parent=5 // pred_fallthru
        _
      %p258 = scmp.lt.s32.totalorder %s19, 2
      // Predicated region
      $region29: #{tpu_custom_call.1} parent=5 // pred_check
        %p259 = pneg %p258
      $region30: #{tpu_custom_call.1} parent=5 // pred_check_branch
        %261 = sbr.rel (%p259) target = $region32
      $region31: #{tpu_custom_call.1} parent=5 // pred_region
        // Predicated region
        $region33: #{tpu_custom_call.1} parent=31 // pred_check
          %p262 = pneg %p53
        $region34: #{tpu_custom_call.1} parent=31 // pred_check_branch
          %264 = sbr.rel (%p262) target = $region36
        $region35: #{tpu_custom_call.1} parent=31 // pred_region
          %s265 = sand.u32 %s43, 1
          %s266 = scalar_lea.sflag [#allocation3], %s265
          %s267 = sand.u32 %s43, 1
          %s268 = smul.addr %s267, 16
          %s269 = scalar_lea.vmem [#allocation2], %s268
          %s270 = smul.u32 2, %s26
          %s272 = ssub.s32 256, 256
          %273 = vsyncadd %s266, %s272
          %s274 = smul.addr %s27, 2
          %s275 = sadd.s32 %s270, %s274
          %s276 = smul.addr %s275, 128
          %s277 = scalar_lea.hbm %s0, %s276
          %s279 = sshll.u32 %s269, 4
          %s280 = int_to_ptr.vmem [resolvable:$true] %s279
          %282 = dma.hbm_to_vmem [thread:$0]  %s277, 256, %s280, %s266
        $region36: #{tpu_custom_call.1} parent=31 // pred_fallthru
          _
      $region32: #{tpu_custom_call.1} parent=5 // pred_fallthru
        _
      %p283 = scmp.le.s32.totalorder 1, %s19
      %p284 = scmp.lt.s32.totalorder %s19, 3
      %p285 = pnand %p283, %p284
      %p286 = pneg %p285
      // Predicated region
      $region37: #{tpu_custom_call.1} parent=5 // pred_check
        _
      $region38: #{tpu_custom_call.1} parent=5 // pred_check_branch
        %288 = sbr.rel (%p285) target = $region40
      $region39: #{tpu_custom_call.1} parent=5 // pred_region
        %s289 = ssub.s32 %s19, 1
        %s290 = sand.u32 %s46, 1
        %s291 = scalar_lea.sflag [#allocation3], %s290
        %s292 = sand.u32 %s46, 1
        %s293 = smul.addr %s292, 16
        %s294 = scalar_lea.vmem [#allocation2], %s293
        // Predicated region
        $region41: #{tpu_custom_call.1} parent=39 // pred_check
          %p295 = pneg %p59
        $region42: #{tpu_custom_call.1} parent=39 // pred_check_branch
          %297 = sbr.rel (%p295) target = $region44
        $region43: #{tpu_custom_call.1} parent=39 // pred_region
          %298 = dma.done %s291, 256
        $region44: #{tpu_custom_call.1} parent=39 // pred_fallthru
          _
        // Predicated region
        $region45: #{tpu_custom_call.1} parent=39 // pred_check
          %p299 = pneg %p85
        $region46: #{tpu_custom_call.1} parent=39 // pred_check_branch
          %301 = sbr.rel (%p299) target = $region48
        $region47: #{tpu_custom_call.1} parent=39 // pred_region
          %302 = dma.done [#allocation6], 16384
        $region48: #{tpu_custom_call.1} parent=39 // pred_fallthru
          _
        // Predicated region
        $region49: #{tpu_custom_call.1} parent=39 // pred_check
          %p303 = pneg %p111
        $region50: #{tpu_custom_call.1} parent=39 // pred_check_branch
          %305 = sbr.rel (%p303) target = $region52
        $region51: #{tpu_custom_call.1} parent=39 // pred_region
          %306 = dma.done [#allocation6], 64
        $region52: #{tpu_custom_call.1} parent=39 // pred_fallthru
          _
        // Predicated region
        $region53: #{tpu_custom_call.1} parent=39 // pred_check
          %p307 = pneg %p137
        $region54: #{tpu_custom_call.1} parent=39 // pred_check_branch
          %309 = sbr.rel (%p307) target = $region56
        $region55: #{tpu_custom_call.1} parent=39 // pred_region
          %310 = dma.done [#allocation9], 8192
        $region56: #{tpu_custom_call.1} parent=39 // pred_fallthru
          _
        %s311 = sand.u32 %s46, 1
        %s312 = scalar_lea.sflag [#allocation3], %s311
        %s313 = sand.u32 %s46, 1
        %s314 = smul.addr %s313, 16
        %s315 = scalar_lea.vmem [#allocation2], %s314
        %p316 = pneg %p59
        %p317 = pneg %p56
        %p318 = pneg %p85
        %p319 = pneg %p82
        %p320 = pneg %p111
        %p321 = pneg %p108
        %p322 = pneg %p137
        %p323 = pneg %p134
        %p324 = scmp.lt.s32.totalorder %s28, 0
        %s325 = scalar_select %p324, %s28, 0
        %s326 = scalar_lea.vmem %s4, %s325
        %p327 = pneg %p163
        %p328 = pneg %p160
        %p329 = pneg %p191
        %p330 = pneg %p188
        %s331 = sand.u32 %s178, 1
        %s332 = scalar_lea.sflag [#allocation4], %s331
        %s333 = sand.u32 %s178, 1
        %s334 = smul.addr %s333, 8
        %s335 = scalar_lea.vmem [#allocation10], %s334
        %s336 = smul.u32 2, %s28
        %p337 = scmp.lt.s32.totalorder %s28, 0
        %s338 = scalar_select %p337, %s28, 0
        %s339 = scalar_lea.vmem %s4, %s338
        %v340 = vld [vmem:[%s294] sm:$0xff]
        %v341 = vld [vmem:[%s294 + $0x8] sm:$0xff]
        %v342 = vld [vmem:[#allocation5] sm:$0xff]
        %v343 = vld [vmem:[#allocation5 + $0x8] sm:$0xff]
        %v344 = vld [vmem:[#allocation5 + $0x10] sm:$0xff]
        %v345 = vld [vmem:[#allocation5 + $0x18] sm:$0xff]
        %v346 = vld [vmem:[#allocation5 + $0x20] sm:$0xff]
        %v347 = vld [vmem:[#allocation5 + $0x28] sm:$0xff]
        %v348 = vld [vmem:[#allocation5 + $0x30] sm:$0xff]
        %v349 = vld [vmem:[#allocation5 + $0x38] sm:$0xff]
        %v350 = vld [vmem:[#allocation5 + $0x40] sm:$0xff]
        %v351 = vld [vmem:[#allocation5 + $0x48] sm:$0xff]
        %v352 = vld [vmem:[#allocation5 + $0x50] sm:$0xff]
        %v353 = vld [vmem:[#allocation5 + $0x58] sm:$0xff]
        %v354 = vld [vmem:[#allocation5 + $0x60] sm:$0xff]
        %v355 = vld [vmem:[#allocation5 + $0x68] sm:$0xff]
        %v356 = vld [vmem:[#allocation5 + $0x70] sm:$0xff]
        %v357 = vld [vmem:[#allocation5 + $0x78] sm:$0xff]
        %v358 = vld [vmem:[#allocation5 + $0x80] sm:$0xff]
        %v359 = vld [vmem:[#allocation5 + $0x88] sm:$0xff]
        %v360 = vld [vmem:[#allocation5 + $0x90] sm:$0xff]
        %v361 = vld [vmem:[#allocation5 + $0x98] sm:$0xff]
        %v362 = vld [vmem:[#allocation5 + $0xa0] sm:$0xff]
        %v363 = vld [vmem:[#allocation5 + $0xa8] sm:$0xff]
        %v364 = vld [vmem:[#allocation5 + $0xb0] sm:$0xff]
        %v365 = vld [vmem:[#allocation5 + $0xb8] sm:$0xff]
        %v366 = vld [vmem:[#allocation5 + $0xc0] sm:$0xff]
        %v367 = vld [vmem:[#allocation5 + $0xc8] sm:$0xff]
        %v368 = vld [vmem:[#allocation5 + $0xd0] sm:$0xff]
        %v369 = vld [vmem:[#allocation5 + $0xd8] sm:$0xff]
        %v370 = vld [vmem:[#allocation5 + $0xe0] sm:$0xff]
        %v371 = vld [vmem:[#allocation5 + $0xe8] sm:$0xff]
        %v372 = vld [vmem:[#allocation5 + $0xf0] sm:$0xff]
        %v373 = vld [vmem:[#allocation5 + $0xf8] sm:$0xff]
        %v374 = vld [vmem:[#allocation5 + $0x100] sm:$0xff]
        %v375 = vld [vmem:[#allocation5 + $0x108] sm:$0xff]
        %v376 = vld [vmem:[#allocation5 + $0x110] sm:$0xff]
        %v377 = vld [vmem:[#allocation5 + $0x118] sm:$0xff]
        %v378 = vld [vmem:[#allocation5 + $0x120] sm:$0xff]
        %v379 = vld [vmem:[#allocation5 + $0x128] sm:$0xff]
        %v380 = vld [vmem:[#allocation5 + $0x130] sm:$0xff]
        %v381 = vld [vmem:[#allocation5 + $0x138] sm:$0xff]
        %v382 = vld [vmem:[#allocation5 + $0x140] sm:$0xff]
        %v383 = vld [vmem:[#allocation5 + $0x148] sm:$0xff]
        %v384 = vld [vmem:[#allocation5 + $0x150] sm:$0xff]
        %v385 = vld [vmem:[#allocation5 + $0x158] sm:$0xff]
        %v386 = vld [vmem:[#allocation5 + $0x160] sm:$0xff]
        %v387 = vld [vmem:[#allocation5 + $0x168] sm:$0xff]
        %v388 = vld [vmem:[#allocation5 + $0x170] sm:$0xff]
        %v389 = vld [vmem:[#allocation5 + $0x178] sm:$0xff]
        %v390 = vld [vmem:[#allocation5 + $0x180] sm:$0xff]
        %v391 = vld [vmem:[#allocation5 + $0x188] sm:$0xff]
        %v392 = vld [vmem:[#allocation5 + $0x190] sm:$0xff]
        %v393 = vld [vmem:[#allocation5 + $0x198] sm:$0xff]
        %v394 = vld [vmem:[#allocation5 + $0x1a0] sm:$0xff]
        %v395 = vld [vmem:[#allocation5 + $0x1a8] sm:$0xff]
        %v396 = vld [vmem:[#allocation5 + $0x1b0] sm:$0xff]
        %v397 = vld [vmem:[#allocation5 + $0x1b8] sm:$0xff]
        %v398 = vld [vmem:[#allocation5 + $0x1c0] sm:$0xff]
        %v399 = vld [vmem:[#allocation5 + $0x1c8] sm:$0xff]
        %v400 = vld [vmem:[#allocation5 + $0x1d0] sm:$0xff]
        %v401 = vld [vmem:[#allocation5 + $0x1d8] sm:$0xff]
        %v402 = vld [vmem:[#allocation5 + $0x1e0] sm:$0xff]
        %v403 = vld [vmem:[#allocation5 + $0x1e8] sm:$0xff]
        %v404 = vld [vmem:[#allocation5 + $0x1f0] sm:$0xff]
        %v405 = vld [vmem:[#allocation5 + $0x1f8] sm:$0xff]
        %v406 = vld [vmem:[#allocation5 + $0x200] sm:$0xff]
        %v407 = vld [vmem:[#allocation5 + $0x208] sm:$0xff]
        %v408 = vld [vmem:[#allocation5 + $0x210] sm:$0xff]
        %v409 = vld [vmem:[#allocation5 + $0x218] sm:$0xff]
        %v410 = vld [vmem:[#allocation5 + $0x220] sm:$0xff]
        %v411 = vld [vmem:[#allocation5 + $0x228] sm:$0xff]
        %v412 = vld [vmem:[#allocation5 + $0x230] sm:$0xff]
        %v413 = vld [vmem:[#allocation5 + $0x238] sm:$0xff]
        %v414 = vld [vmem:[#allocation5 + $0x240] sm:$0xff]
        %v415 = vld [vmem:[#allocation5 + $0x248] sm:$0xff]
        %v416 = vld [vmem:[#allocation5 + $0x250] sm:$0xff]
        %v417 = vld [vmem:[#allocation5 + $0x258] sm:$0xff]
        %v418 = vld [vmem:[#allocation5 + $0x260] sm:$0xff]
        %v419 = vld [vmem:[#allocation5 + $0x268] sm:$0xff]
        %v420 = vld [vmem:[#allocation5 + $0x270] sm:$0xff]
        %v421 = vld [vmem:[#allocation5 + $0x278] sm:$0xff]
        %v422 = vld [vmem:[#allocation5 + $0x280] sm:$0xff]
        %v423 = vld [vmem:[#allocation5 + $0x288] sm:$0xff]
        %v424 = vld [vmem:[#allocation5 + $0x290] sm:$0xff]
        %v425 = vld [vmem:[#allocation5 + $0x298] sm:$0xff]
        %v426 = vld [vmem:[#allocation5 + $0x2a0] sm:$0xff]
        %v427 = vld [vmem:[#allocation5 + $0x2a8] sm:$0xff]
        %v428 = vld [vmem:[#allocation5 + $0x2b0] sm:$0xff]
        %v429 = vld [vmem:[#allocation5 + $0x2b8] sm:$0xff]
        %v430 = vld [vmem:[#allocation5 + $0x2c0] sm:$0xff]
        %v431 = vld [vmem:[#allocation5 + $0x2c8] sm:$0xff]
        %v432 = vld [vmem:[#allocation5 + $0x2d0] sm:$0xff]
        %v433 = vld [vmem:[#allocation5 + $0x2d8] sm:$0xff]
        %v434 = vld [vmem:[#allocation5 + $0x2e0] sm:$0xff]
        %v435 = vld [vmem:[#allocation5 + $0x2e8] sm:$0xff]
        %v436 = vld [vmem:[#allocation5 + $0x2f0] sm:$0xff]
        %v437 = vld [vmem:[#allocation5 + $0x2f8] sm:$0xff]
        %v438 = vld [vmem:[#allocation5 + $0x300] sm:$0xff]
        %v439 = vld [vmem:[#allocation5 + $0x308] sm:$0xff]
        %v440 = vld [vmem:[#allocation5 + $0x310] sm:$0xff]
        %v441 = vld [vmem:[#allocation5 + $0x318] sm:$0xff]
        %v442 = vld [vmem:[#allocation5 + $0x320] sm:$0xff]
        %v443 = vld [vmem:[#allocation5 + $0x328] sm:$0xff]
        %v444 = vld [vmem:[#allocation5 + $0x330] sm:$0xff]
        %v445 = vld [vmem:[#allocation5 + $0x338] sm:$0xff]
        %v446 = vld [vmem:[#allocation5 + $0x340] sm:$0xff]
        %v447 = vld [vmem:[#allocation5 + $0x348] sm:$0xff]
        %v448 = vld [vmem:[#allocation5 + $0x350] sm:$0xff]
        %v449 = vld [vmem:[#allocation5 + $0x358] sm:$0xff]
        %v450 = vld [vmem:[#allocation5 + $0x360] sm:$0xff]
        %v451 = vld [vmem:[#allocation5 + $0x368] sm:$0xff]
        %v452 = vld [vmem:[#allocation5 + $0x370] sm:$0xff]
        %v453 = vld [vmem:[#allocation5 + $0x378] sm:$0xff]
        %v454 = vld [vmem:[#allocation5 + $0x380] sm:$0xff]
        %v455 = vld [vmem:[#allocation5 + $0x388] sm:$0xff]
        %v456 = vld [vmem:[#allocation5 + $0x390] sm:$0xff]
        %v457 = vld [vmem:[#allocation5 + $0x398] sm:$0xff]
        %v458 = vld [vmem:[#allocation5 + $0x3a0] sm:$0xff]
        %v459 = vld [vmem:[#allocation5 + $0x3a8] sm:$0xff]
        %v460 = vld [vmem:[#allocation5 + $0x3b0] sm:$0xff]
        %v461 = vld [vmem:[#allocation5 + $0x3b8] sm:$0xff]
        %v462 = vld [vmem:[#allocation5 + $0x3c0] sm:$0xff]
        %v463 = vld [vmem:[#allocation5 + $0x3c8] sm:$0xff]
        %v464 = vld [vmem:[#allocation5 + $0x3d0] sm:$0xff]
        %v465 = vld [vmem:[#allocation5 + $0x3d8] sm:$0xff]
        %v466 = vld [vmem:[#allocation5 + $0x3e0] sm:$0xff]
        %v467 = vld [vmem:[#allocation5 + $0x3e8] sm:$0xff]
        %v468 = vld [vmem:[#allocation5 + $0x3f0] sm:$0xff]
        %v469 = vld [vmem:[#allocation5 + $0x3f8] sm:$0xff]
        %v470 = vld [vmem:[#allocation7] sm:$0xf]
        %v472 = vlaneseq
        %v473 = vshrl.u32 %v472, 7
        %v474 = vsub.s32 0, %v473
        %v475 = vrot.slane %v470, %v474
        %v476 = vlaneseq
        %v477 = vshrl.u32 %v476, 7
        %v478 = vsub.s32 1, %v477
        %v479 = vrot.slane %v470, %v478
        %v480 = vlaneseq
        %v481 = vshrl.u32 %v480, 7
        %v482 = vsub.s32 2, %v481
        %v483 = vrot.slane %v470, %v482
        %v484 = vlaneseq
        %v485 = vshrl.u32 %v484, 7
        %v486 = vsub.s32 3, %v485
        %v487 = vrot.slane %v470, %v486
        %492 = vmatprep.subr.mxu0 %v403
        %493 = vmatpush1.msra.mxu0 %v402
        %494 = vmatprep.subr.mxu0 %v399
        %495 = vmatpush1.msra.mxu0 %v398
        %496 = vmatprep.subr.mxu0 %v395
        %497 = vmatpush1.msra.mxu0 %v394
        %498 = vmatprep.subr.mxu0 %v391
        %499 = vmatpush1.msra.mxu0 %v390
        %500 = vmatprep.subr.mxu0 %v387
        %501 = vmatpush1.msra.mxu0 %v386
        %502 = vmatprep.subr.mxu0 %v383
        %503 = vmatpush1.msra.mxu0 %v382
        %504 = vmatprep.subr.mxu0 %v379
        %505 = vmatpush1.msra.mxu0 %v378
        %506 = vmatprep.subr.mxu0 %v375
        %507 = vmatpush1.msra.mxu0 %v374
        %508 = vmatprep.subr.mxu0 %v371
        %509 = vmatpush1.msra.mxu0 %v370
        %510 = vmatprep.subr.mxu0 %v367
        %511 = vmatpush1.msra.mxu0 %v366
        %512 = vmatprep.subr.mxu0 %v363
        %513 = vmatpush1.msra.mxu0 %v362
        %514 = vmatprep.subr.mxu0 %v359
        %515 = vmatpush1.msra.mxu0 %v358
        %516 = vmatprep.subr.mxu0 %v355
        %517 = vmatpush1.msra.mxu0 %v354
        %518 = vmatprep.subr.mxu0 %v351
        %519 = vmatpush1.msra.mxu0 %v350
        %520 = vmatprep.subr.mxu0 %v347
        %521 = vmatpush1.msra.mxu0 %v346
        %522 = vmatprep.subr.mxu0 %v343
        %523 = vmatpush1.msra.mxu0 %v342
        %524 = vmatprep.subr.mxu0 %v467
        %525 = vmatpush2.msra.mxu0 %v466
        %526 = vmatprep.subr.mxu0 %v463
        %527 = vmatpush2.msra.mxu0 %v462
        %528 = vmatprep.subr.mxu0 %v459
        %529 = vmatpush2.msra.mxu0 %v458
        %530 = vmatprep.subr.mxu0 %v455
        %531 = vmatpush2.msra.mxu0 %v454
        %532 = vmatprep.subr.mxu0 %v451
        %533 = vmatpush2.msra.mxu0 %v450
        %534 = vmatprep.subr.mxu0 %v447
        %535 = vmatpush2.msra.mxu0 %v446
        %536 = vmatprep.subr.mxu0 %v443
        %537 = vmatpush2.msra.mxu0 %v442
        %538 = vmatprep.subr.mxu0 %v439
        %539 = vmatpush2.msra.mxu0 %v438
        %540 = vmatprep.subr.mxu0 %v435
        %541 = vmatpush2.msra.mxu0 %v434
        %542 = vmatprep.subr.mxu0 %v431
        %543 = vmatpush2.msra.mxu0 %v430
        %544 = vmatprep.subr.mxu0 %v427
        %545 = vmatpush2.msra.mxu0 %v426
        %546 = vmatprep.subr.mxu0 %v423
        %547 = vmatpush2.msra.mxu0 %v422
        %548 = vmatprep.subr.mxu0 %v419
        %549 = vmatpush2.msra.mxu0 %v418
        %550 = vmatprep.subr.mxu0 %v415
        %551 = vmatpush2.msra.mxu0 %v414
        %552 = vmatprep.subr.mxu0 %v411
        %553 = vmatpush2.msra.mxu0 %v410
        %554 = vmatprep.subr.mxu0 %v407
        %555 = vmatpush2.msra.mxu0 %v406
        %556 = vmatprep.mubr.f32.mxu0 %v341
        %557 = vmatmul.mubr.f32.gmra.mxu0 %v340
        %v558 = vpop.f32.mrf.mxu0
        %v559 = vadd.f32 %v475, %v558
        %v560 = vpop.f32.mrf.mxu0
        %v561 = vadd.f32 %v479, %v560
        %562 = vdwg.mxu0
        %563 = vmatprep.subr.mxu0 %v405
        %564 = vmatpush1.msra.mxu0 %v404
        %565 = vmatprep.subr.mxu0 %v401
        %566 = vmatpush1.msra.mxu0 %v400
        %567 = vmatprep.subr.mxu0 %v397
        %568 = vmatpush1.msra.mxu0 %v396
        %569 = vmatprep.subr.mxu0 %v393
        %570 = vmatpush1.msra.mxu0 %v392
        %571 = vmatprep.subr.mxu0 %v389
        %572 = vmatpush1.msra.mxu0 %v388
        %573 = vmatprep.subr.mxu0 %v385
        %574 = vmatpush1.msra.mxu0 %v384
        %575 = vmatprep.subr.mxu0 %v381
        %576 = vmatpush1.msra.mxu0 %v380
        %577 = vmatprep.subr.mxu0 %v377
        %578 = vmatpush1.msra.mxu0 %v376
        %579 = vmatprep.subr.mxu0 %v373
        %580 = vmatpush1.msra.mxu0 %v372
        %581 = vmatprep.subr.mxu0 %v369
        %582 = vmatpush1.msra.mxu0 %v368
        %583 = vmatprep.subr.mxu0 %v365
        %584 = vmatpush1.msra.mxu0 %v364
        %585 = vmatprep.subr.mxu0 %v361
        %586 = vmatpush1.msra.mxu0 %v360
        %587 = vmatprep.subr.mxu0 %v357
        %588 = vmatpush1.msra.mxu0 %v356
        %589 = vmatprep.subr.mxu0 %v353
        %590 = vmatpush1.msra.mxu0 %v352
        %591 = vmatprep.subr.mxu0 %v349
        %592 = vmatpush1.msra.mxu0 %v348
        %593 = vmatprep.subr.mxu0 %v345
        %594 = vmatpush1.msra.mxu0 %v344
        %595 = vmatprep.subr.mxu0 %v469
        %596 = vmatpush2.msra.mxu0 %v468
        %597 = vmatprep.subr.mxu0 %v465
        %598 = vmatpush2.msra.mxu0 %v464
        %599 = vmatprep.subr.mxu0 %v461
        %600 = vmatpush2.msra.mxu0 %v460
        %601 = vmatprep.subr.mxu0 %v457
        %602 = vmatpush2.msra.mxu0 %v456
        %603 = vmatprep.subr.mxu0 %v453
        %604 = vmatpush2.msra.mxu0 %v452
        %605 = vmatprep.subr.mxu0 %v449
        %606 = vmatpush2.msra.mxu0 %v448
        %607 = vmatprep.subr.mxu0 %v445
        %608 = vmatpush2.msra.mxu0 %v444
        %609 = vmatprep.subr.mxu0 %v441
        %610 = vmatpush2.msra.mxu0 %v440
        %611 = vmatprep.subr.mxu0 %v437
        %612 = vmatpush2.msra.mxu0 %v436
        %613 = vmatprep.subr.mxu0 %v433
        %614 = vmatpush2.msra.mxu0 %v432
        %615 = vmatprep.subr.mxu0 %v429
        %616 = vmatpush2.msra.mxu0 %v428
        %617 = vmatprep.subr.mxu0 %v425
        %618 = vmatpush2.msra.mxu0 %v424
        %619 = vmatprep.subr.mxu0 %v421
        %620 = vmatpush2.msra.mxu0 %v420
        %621 = vmatprep.subr.mxu0 %v417
        %622 = vmatpush2.msra.mxu0 %v416
        %623 = vmatprep.subr.mxu0 %v413
        %624 = vmatpush2.msra.mxu0 %v412
        %625 = vmatprep.subr.mxu0 %v409
        %626 = vmatpush2.msra.mxu0 %v408
        %627 = vmatprep.mubr.f32.mxu0 %v341
        %628 = vmatmul.mubr.f32.gmra.mxu0 %v340
        %v629 = vpop.f32.mrf.mxu0
        %v630 = vadd.f32 %v483, %v629
        %v631 = vpop.f32.mrf.mxu0
        %v632 = vadd.f32 %v487, %v631
        %633 = vdwg.mxu0
        %v634 = vmax.f32 %v559, 0.0
        %v635 = vmax.f32 %v561, 0.0
        %v636 = vmax.f32 %v630, 0.0
        %v637 = vmax.f32 %v632, 0.0
        %v638 = vld [vmem:[#allocation8] sm:$0xff]
        %v639 = vld [vmem:[#allocation8 + $0x8] sm:$0xff]
        %v640 = vld [vmem:[#allocation8 + $0x10] sm:$0xff]
        %v641 = vld [vmem:[#allocation8 + $0x18] sm:$0xff]
        %v642 = vld [vmem:[#allocation8 + $0x20] sm:$0xff]
        %v643 = vld [vmem:[#allocation8 + $0x28] sm:$0xff]
        %v644 = vld [vmem:[#allocation8 + $0x30] sm:$0xff]
        %v645 = vld [vmem:[#allocation8 + $0x38] sm:$0xff]
        %v646 = vld [vmem:[#allocation8 + $0x40] sm:$0xff]
        %v647 = vld [vmem:[#allocation8 + $0x48] sm:$0xff]
        %v648 = vld [vmem:[#allocation8 + $0x50] sm:$0xff]
        %v649 = vld [vmem:[#allocation8 + $0x58] sm:$0xff]
        %v650 = vld [vmem:[#allocation8 + $0x60] sm:$0xff]
        %v651 = vld [vmem:[#allocation8 + $0x68] sm:$0xff]
        %v652 = vld [vmem:[#allocation8 + $0x70] sm:$0xff]
        %v653 = vld [vmem:[#allocation8 + $0x78] sm:$0xff]
        %v654 = vld [vmem:[#allocation8 + $0x80] sm:$0xff]
        %v655 = vld [vmem:[#allocation8 + $0x88] sm:$0xff]
        %v656 = vld [vmem:[#allocation8 + $0x90] sm:$0xff]
        %v657 = vld [vmem:[#allocation8 + $0x98] sm:$0xff]
        %v658 = vld [vmem:[#allocation8 + $0xa0] sm:$0xff]
        %v659 = vld [vmem:[#allocation8 + $0xa8] sm:$0xff]
        %v660 = vld [vmem:[#allocation8 + $0xb0] sm:$0xff]
        %v661 = vld [vmem:[#allocation8 + $0xb8] sm:$0xff]
        %v662 = vld [vmem:[#allocation8 + $0xc0] sm:$0xff]
        %v663 = vld [vmem:[#allocation8 + $0xc8] sm:$0xff]
        %v664 = vld [vmem:[#allocation8 + $0xd0] sm:$0xff]
        %v665 = vld [vmem:[#allocation8 + $0xd8] sm:$0xff]
        %v666 = vld [vmem:[#allocation8 + $0xe0] sm:$0xff]
        %v667 = vld [vmem:[#allocation8 + $0xe8] sm:$0xff]
        %v668 = vld [vmem:[#allocation8 + $0xf0] sm:$0xff]
        %v669 = vld [vmem:[#allocation8 + $0xf8] sm:$0xff]
        %v670 = vld [vmem:[#allocation8 + $0x100] sm:$0xff]
        %v671 = vld [vmem:[#allocation8 + $0x108] sm:$0xff]
        %v672 = vld [vmem:[#allocation8 + $0x110] sm:$0xff]
        %v673 = vld [vmem:[#allocation8 + $0x118] sm:$0xff]
        %v674 = vld [vmem:[#allocation8 + $0x120] sm:$0xff]
        %v675 = vld [vmem:[#allocation8 + $0x128] sm:$0xff]
        %v676 = vld [vmem:[#allocation8 + $0x130] sm:$0xff]
        %v677 = vld [vmem:[#allocation8 + $0x138] sm:$0xff]
        %v678 = vld [vmem:[#allocation8 + $0x140] sm:$0xff]
        %v679 = vld [vmem:[#allocation8 + $0x148] sm:$0xff]
        %v680 = vld [vmem:[#allocation8 + $0x150] sm:$0xff]
        %v681 = vld [vmem:[#allocation8 + $0x158] sm:$0xff]
        %v682 = vld [vmem:[#allocation8 + $0x160] sm:$0xff]
        %v683 = vld [vmem:[#allocation8 + $0x168] sm:$0xff]
        %v684 = vld [vmem:[#allocation8 + $0x170] sm:$0xff]
        %v685 = vld [vmem:[#allocation8 + $0x178] sm:$0xff]
        %v686 = vld [vmem:[#allocation8 + $0x180] sm:$0xff]
        %v687 = vld [vmem:[#allocation8 + $0x188] sm:$0xff]
        %v688 = vld [vmem:[#allocation8 + $0x190] sm:$0xff]
        %v689 = vld [vmem:[#allocation8 + $0x198] sm:$0xff]
        %v690 = vld [vmem:[#allocation8 + $0x1a0] sm:$0xff]
        %v691 = vld [vmem:[#allocation8 + $0x1a8] sm:$0xff]
        %v692 = vld [vmem:[#allocation8 + $0x1b0] sm:$0xff]
        %v693 = vld [vmem:[#allocation8 + $0x1b8] sm:$0xff]
        %v694 = vld [vmem:[#allocation8 + $0x1c0] sm:$0xff]
        %v695 = vld [vmem:[#allocation8 + $0x1c8] sm:$0xff]
        %v696 = vld [vmem:[#allocation8 + $0x1d0] sm:$0xff]
        %v697 = vld [vmem:[#allocation8 + $0x1d8] sm:$0xff]
        %v698 = vld [vmem:[#allocation8 + $0x1e0] sm:$0xff]
        %v699 = vld [vmem:[#allocation8 + $0x1e8] sm:$0xff]
        %v700 = vld [vmem:[#allocation8 + $0x1f0] sm:$0xff]
        %v701 = vld [vmem:[#allocation8 + $0x1f8] sm:$0xff]
        %v702 = vld [vmem:[%s339] sm:$0x1]
        %v704 = vlaneseq
        %v705 = vshrl.u32 %v704, 7
        %v706 = vsub.s32 0, %v705
        %v707 = vrot.slane %v702, %v706
        %709 = vmatprep.subr.mxu0 0.0
        %710 = vmatpush1.msra.mxu0 %v653
        %711 = vmatprep.subr.mxu0 0.0
        %712 = vmatpush1.msra.mxu0 %v652
        %713 = vmatprep.subr.mxu0 0.0
        %714 = vmatpush1.msra.mxu0 %v651
        %715 = vmatprep.subr.mxu0 0.0
        %716 = vmatpush1.msra.mxu0 %v650
        %717 = vmatprep.subr.mxu0 0.0
        %718 = vmatpush1.msra.mxu0 %v649
        %719 = vmatprep.subr.mxu0 0.0
        %720 = vmatpush1.msra.mxu0 %v648
        %721 = vmatprep.subr.mxu0 0.0
        %722 = vmatpush1.msra.mxu0 %v647
        %723 = vmatprep.subr.mxu0 0.0
        %724 = vmatpush1.msra.mxu0 %v646
        %725 = vmatprep.subr.mxu0 0.0
        %726 = vmatpush1.msra.mxu0 %v645
        %727 = vmatprep.subr.mxu0 0.0
        %728 = vmatpush1.msra.mxu0 %v644
        %729 = vmatprep.subr.mxu0 0.0
        %730 = vmatpush1.msra.mxu0 %v643
        %731 = vmatprep.subr.mxu0 0.0
        %732 = vmatpush1.msra.mxu0 %v642
        %733 = vmatprep.subr.mxu0 0.0
        %734 = vmatpush1.msra.mxu0 %v641
        %735 = vmatprep.subr.mxu0 0.0
        %736 = vmatpush1.msra.mxu0 %v640
        %737 = vmatprep.subr.mxu0 0.0
        %738 = vmatpush1.msra.mxu0 %v639
        %739 = vmatprep.subr.mxu0 0.0
        %740 = vmatpush1.msra.mxu0 %v638
        %741 = vmatprep.subr.mxu0 0.0
        %742 = vmatpush2.msra.mxu0 %v669
        %743 = vmatprep.subr.mxu0 0.0
        %744 = vmatpush2.msra.mxu0 %v668
        %745 = vmatprep.subr.mxu0 0.0
        %746 = vmatpush2.msra.mxu0 %v667
        %747 = vmatprep.subr.mxu0 0.0
        %748 = vmatpush2.msra.mxu0 %v666
        %749 = vmatprep.subr.mxu0 0.0
        %750 = vmatpush2.msra.mxu0 %v665
        %751 = vmatprep.subr.mxu0 0.0
        %752 = vmatpush2.msra.mxu0 %v664
        %753 = vmatprep.subr.mxu0 0.0
        %754 = vmatpush2.msra.mxu0 %v663
        %755 = vmatprep.subr.mxu0 0.0
        %756 = vmatpush2.msra.mxu0 %v662
        %757 = vmatprep.subr.mxu0 0.0
        %758 = vmatpush2.msra.mxu0 %v661
        %759 = vmatprep.subr.mxu0 0.0
        %760 = vmatpush2.msra.mxu0 %v660
        %761 = vmatprep.subr.mxu0 0.0
        %762 = vmatpush2.msra.mxu0 %v659
        %763 = vmatprep.subr.mxu0 0.0
        %764 = vmatpush2.msra.mxu0 %v658
        %765 = vmatprep.subr.mxu0 0.0
        %766 = vmatpush2.msra.mxu0 %v657
        %767 = vmatprep.subr.mxu0 0.0
        %768 = vmatpush2.msra.mxu0 %v656
        %769 = vmatprep.subr.mxu0 0.0
        %770 = vmatpush2.msra.mxu0 %v655
        %771 = vmatprep.subr.mxu0 0.0
        %772 = vmatpush2.msra.mxu0 %v654
        %773 = vmatprep.mubr.f32.mxu0 %v635
        %774 = vmatmul.mubr.f32.gmra.mxu0 %v634
        %v775 = vpop.f32.mrf.mxu0
        %v776 = vadd.f32 %v707, %v775
        %v777 = vpop.f32.mrf.mxu0
        %778 = vdwg.mxu0
        %779 = vmatprep.subr.mxu0 0.0
        %780 = vmatpush1.msra.mxu0 %v685
        %781 = vmatprep.subr.mxu0 0.0
        %782 = vmatpush1.msra.mxu0 %v684
        %783 = vmatprep.subr.mxu0 0.0
        %784 = vmatpush1.msra.mxu0 %v683
        %785 = vmatprep.subr.mxu0 0.0
        %786 = vmatpush1.msra.mxu0 %v682
        %787 = vmatprep.subr.mxu0 0.0
        %788 = vmatpush1.msra.mxu0 %v681
        %789 = vmatprep.subr.mxu0 0.0
        %790 = vmatpush1.msra.mxu0 %v680
        %791 = vmatprep.subr.mxu0 0.0
        %792 = vmatpush1.msra.mxu0 %v679
        %793 = vmatprep.subr.mxu0 0.0
        %794 = vmatpush1.msra.mxu0 %v678
        %795 = vmatprep.subr.mxu0 0.0
        %796 = vmatpush1.msra.mxu0 %v677
        %797 = vmatprep.subr.mxu0 0.0
        %798 = vmatpush1.msra.mxu0 %v676
        %799 = vmatprep.subr.mxu0 0.0
        %800 = vmatpush1.msra.mxu0 %v675
        %801 = vmatprep.subr.mxu0 0.0
        %802 = vmatpush1.msra.mxu0 %v674
        %803 = vmatprep.subr.mxu0 0.0
        %804 = vmatpush1.msra.mxu0 %v673
        %805 = vmatprep.subr.mxu0 0.0
        %806 = vmatpush1.msra.mxu0 %v672
        %807 = vmatprep.subr.mxu0 0.0
        %808 = vmatpush1.msra.mxu0 %v671
        %809 = vmatprep.subr.mxu0 0.0
        %810 = vmatpush1.msra.mxu0 %v670
        %811 = vmatprep.subr.mxu0 0.0
        %812 = vmatpush2.msra.mxu0 %v701
        %813 = vmatprep.subr.mxu0 0.0
        %814 = vmatpush2.msra.mxu0 %v700
        %815 = vmatprep.subr.mxu0 0.0
        %816 = vmatpush2.msra.mxu0 %v699
        %817 = vmatprep.subr.mxu0 0.0
        %818 = vmatpush2.msra.mxu0 %v698
        %819 = vmatprep.subr.mxu0 0.0
        %820 = vmatpush2.msra.mxu0 %v697
        %821 = vmatprep.subr.mxu0 0.0
        %822 = vmatpush2.msra.mxu0 %v696
        %823 = vmatprep.subr.mxu0 0.0
        %824 = vmatpush2.msra.mxu0 %v695
        %825 = vmatprep.subr.mxu0 0.0
        %826 = vmatpush2.msra.mxu0 %v694
        %827 = vmatprep.subr.mxu0 0.0
        %828 = vmatpush2.msra.mxu0 %v693
        %829 = vmatprep.subr.mxu0 0.0
        %830 = vmatpush2.msra.mxu0 %v692
        %831 = vmatprep.subr.mxu0 0.0
        %832 = vmatpush2.msra.mxu0 %v691
        %833 = vmatprep.subr.mxu0 0.0
        %834 = vmatpush2.msra.mxu0 %v690
        %835 = vmatprep.subr.mxu0 0.0
        %836 = vmatpush2.msra.mxu0 %v689
        %837 = vmatprep.subr.mxu0 0.0
        %838 = vmatpush2.msra.mxu0 %v688
        %839 = vmatprep.subr.mxu0 0.0
        %840 = vmatpush2.msra.mxu0 %v687
        %841 = vmatprep.subr.mxu0 0.0
        %842 = vmatpush2.msra.mxu0 %v686
        %843 = vmatprep.mubr.f32.mxu0 %v637
        %844 = vmatmul.mubr.f32.gmra.mxu0 %v636
        %v845 = vpop.f32.mrf.mxu0
        %v846 = vadd.f32 %v776, %v845
        %v847 = vpop.f32.mrf.mxu0
        %848 = vdwg.mxu0
        %849 = vst [vmem:[%s335] sm:$0xff] %v846
        %s850 = sand.u32 %s178, 1
        %s851 = scalar_lea.sflag [#allocation4], %s850
        %s852 = sand.u32 %s178, 1
        %s853 = smul.addr %s852, 8
        %s854 = scalar_lea.vmem [#allocation10], %s853
        // Predicated region
        $region57: #{tpu_custom_call.1} parent=39 // pred_check
          %p855 = pneg %p188
        $region58: #{tpu_custom_call.1} parent=39 // pred_check_branch
          %857 = sbr.rel (%p855) target = $region60
        $region59: #{tpu_custom_call.1} parent=39 // pred_region
          %s859 = ssub.s32 128, 128
          %860 = vsyncadd %s851, %s859
          %s861 = sadd.s32 %s28, %s29
          %s862 = smul.addr %s861, 128
          %s863 = scalar_lea.hbm %s5, %s862
          %s865 = sshll.u32 %s854, 4
          %s866 = int_to_ptr.vmem [resolvable:$true] %s865
          %868 = dma.vmem_to_hbm [thread:$0]  %s866, 128, %s863, %s851
        $region60: #{tpu_custom_call.1} parent=39 // pred_fallthru
          _
      $region40: #{tpu_custom_call.1} parent=5 // pred_fallthru
        _
      %p869 = scmp.le.s32.totalorder 2, %s19
      // Predicated region
      $region61: #{tpu_custom_call.1} parent=5 // pred_check
        %p870 = pneg %p869
      $region62: #{tpu_custom_call.1} parent=5 // pred_check_branch
        %872 = sbr.rel (%p870) target = $region64
      $region63: #{tpu_custom_call.1} parent=5 // pred_region
        %s873 = ssub.s32 %s19, 2
        // Predicated region
        $region65: #{tpu_custom_call.1} parent=63 // pred_check
          %p874 = pneg %p194
        $region66: #{tpu_custom_call.1} parent=63 // pred_check_branch
          %876 = sbr.rel (%p874) target = $region68
        $region67: #{tpu_custom_call.1} parent=63 // pred_region
          %s877 = sand.u32 %s179, 1
          %s878 = scalar_lea.sflag [#allocation4], %s877
          %s879 = sand.u32 %s179, 1
          %s880 = smul.addr %s879, 8
          %s881 = scalar_lea.vmem [#allocation10], %s880
          %882 = dma.done %s878, 128
        $region68: #{tpu_custom_call.1} parent=63 // pred_fallthru
          _
      $region64: #{tpu_custom_call.1} parent=5 // pred_fallthru
        _
    $region6: #{tpu_custom_call.1} parent=1 // loop_footer
      %s23 = sadd.s32 1, %s19
    $region7: #{tpu_custom_call.1} parent=1 // loop_footer_branch
      %18 = sbr.rel target = $region3
    $region8: #{tpu_custom_call.1} parent=1 // loop_exit
      _
    %883 = vsyncpa [#allocation3], 1
    %s884 = scalar_lea.sflag [#allocation3], 1
    %885 = vsyncpa %s884, 1
    %886 = vsyncpa [#allocation6], 1
    %887 = vsyncpa [#allocation9], 1
    %888 = vsyncpa [#allocation4], 1
    %s889 = scalar_lea.sflag [#allocation4], 1
    %890 = vsyncpa %s889, 1

</llo_original>
